<compile_context>
chip_gen: v5e
topology: v5e:2x2
jax: 0.10.0
libtpu: 0.0.40
codegen_flags: <defaults>
</compile_context>

<pallas_src>
import functools

import jax
import jax.numpy as jnp
from jax.experimental import pallas as pl
from jax.experimental.pallas import tpu as pltpu


# ---------------------------------------------------------------------------
# Kernel
# ---------------------------------------------------------------------------
def _tcl_fused_kernel(x_ref, f23t_ref, f1_ref, o_ref, *, bt, m1, n1):
    """One batch-tile per grid step; everything VMEM-resident.

    x_ref:    (bt*m1, m2*m3)   batch rows folded into the matmul M dim
    f23t_ref: (m2*m3, n2*n3)   combined mode-2/3 factor (grid-resident)
    f1_ref:   (n1, m1)         mode-1 factor            (grid-resident)
    o_ref:    (bt*n1, n2*n3)
    """
    # Modes 2 & 3 in a single MXU pass: K = m2*m3 (128-multiple, well shaped).
    z = jnp.dot(x_ref[...], f23t_ref[...],
                preferred_element_type=jnp.float32)            # (bt*m1, n2*n3)

    # Mode 1: K = m1 is tiny -> keep it OFF the MXU.  Unrolled broadcast-FMAs
    # on the VPU; column slices hoisted out of the batch loop.
    f1 = f1_ref[...].astype(jnp.float32)                        # (n1, m1)
    cols = [f1[:, i:i + 1] for i in range(m1)]                  # (n1, 1) each
    for b in range(bt):
        acc = cols[0] * z[b * m1:b * m1 + 1, :]                 # (n1, n2*n3)
        for i in range(1, m1):
            acc = acc + cols[i] * z[b * m1 + i:b * m1 + i + 1, :]
        o_ref[b * n1:(b + 1) * n1, :] = acc.astype(o_ref.dtype)


# ---------------------------------------------------------------------------
# Wrapper
# ---------------------------------------------------------------------------
def build_combined_factor(f2, f3):
    """F23T[j*m3 + k, q*n3 + r] = F2[q, j] * F3[r, k]  (== kron(F2, F3).T)."""
    n2, m2 = f2.shape
    n3, m3 = f3.shape
    return jnp.einsum('qj,rk->jkqr', f2, f3).reshape(m2 * m3, n2 * n3)


def _pick_batch_tile(B, m1):
    """Largest divisor of B whose row block (bt*m1) stays <= 256 MXU rows."""
    best = 1
    for bt in range(1, B + 1):
        if B % bt == 0 and bt * m1 <= 256:
            best = bt
    return best


# Budget for keeping the kron'ed factor resident in VMEM (v7x scoped default
# is 32 MiB; leave headroom for the double-buffered activation/output blocks).
_F23T_VMEM_BUDGET_BYTES = 12 * 1024 * 1024


@jax.jit
def _tcl_forward_fused(x, f1, f23t):
    B, m1, m2, m3 = x.shape
    n1 = f1.shape[0]
    n23 = f23t.shape[1]
    bt = _pick_batch_tile(B, m1)
    grid = (B // bt,)

    x2 = x.reshape(B * m1, m2 * m3)          # free row-major reshape (no copy)

    itemsize = jnp.dtype(x.dtype).itemsize
    flops = 2 * B * m1 * (m2 * m3) * n23 + 2 * B * n1 * m1 * n23
    bytes_accessed = itemsize * (
        B * m1 * m2 * m3 + m2 * m3 * n23 + n1 * m1 + B * n1 * n23)

    kernel = functools.partial(_tcl_fused_kernel, bt=bt, m1=m1, n1=n1)

    out = pl.pallas_call(
        kernel,
        out_shape=jax.ShapeDtypeStruct((B * n1, n23), x.dtype),
        grid=grid,
        in_specs=[
            # per-step activation rows; (bt*m1, m2*m3) is (8,128)-aligned
            pl.BlockSpec((bt * m1, m2 * m3), lambda g: (g, 0)),
            # factors: same block every step -> stay resident in VMEM
            pl.BlockSpec((m2 * m3, n23), lambda g: (0, 0)),
            pl.BlockSpec((n1, m1), lambda g: (0, 0)),
        ],
        out_specs=pl.BlockSpec((bt * n1, n23), lambda g: (g, 0)),
        compiler_params=pltpu.CompilerParams(
            dimension_semantics=("parallel",)),
        cost_estimate=pl.CostEstimate(
            flops=flops, transcendentals=0, bytes_accessed=bytes_accessed),
    )(x2, f23t.astype(x.dtype), f1.astype(x.dtype))
    return out


def tcl_reference(x, factors):
    """Pure-JAX reference (definition of the three mode products)."""
    y = jnp.einsum('bijk,pi->bpjk', x, factors[0])
    y = jnp.einsum('bpjk,qj->bpqk', y, factors[1])
    y = jnp.einsum('bpqk,rk->bpqr', y, factors[2])
    return y


def tcl_forward(x, factors, f23t=None):
    """Fused 3-mode TCL forward: y = x x_1 F1 x_2 F2 x_3 F3."""
    assert x.ndim == 4 and len(factors) == 3, (
        "fused TCL kernel expects a (B, m1, m2, m3) input and 3 factors")
    B, m1, m2, m3 = x.shape
    f1, f2, f3 = factors
    n1, n2, n3 = f1.shape[0], f2.shape[0], f3.shape[0]
    assert f1.shape == (n1, m1) and f2.shape == (n2, m2) and f3.shape == (n3, m3)

    if f23t is None:
        f23t = build_combined_factor(f2, f3)

    itemsize = jnp.dtype(x.dtype).itemsize
    if f23t.size * itemsize > _F23T_VMEM_BUDGET_BYTES:
        # TODO(synk): tile f23t over the n2*n3 axis with an extra grid dim (or
        # factorize back into separate mode-2 / mode-3 matmuls) when the
        # kron'ed factor no longer fits comfortably in VMEM (v7x: 64 MiB).
        return tcl_reference(x, factors)

    out = _tcl_forward_fused(x, f1, f23t)
    return out.reshape(B, n1, n2, n3)        # free row-major reshape (no copy)


class TCL:
    """JAX/Pallas port of the PyTorch TCL module (forward only, 4-D input)."""

    def __init__(self, input_size, output_size, key):
        self.input_size = list(input_size)
        self.output_size = list(output_size)
        weight_size_x = self.output_size[1:]
        weight_size_y = self.input_size[1:]
        keys = jax.random.split(key, len(weight_size_x))
        self.factors = []
        for k, (size_x, size_y) in zip(keys, zip(weight_size_x, weight_size_y)):
            # deterministic stand-in for torch's uniform_(-0.1, 0.1) init
            self.factors.append(
                jax.random.uniform(
                    k, (size_x, size_y), jnp.float32, minval=-0.1, maxval=0.1
                )
            )
        # Cache the combined mode-2/3 factor once (hoisted out of the forward).
        self.f23t = build_combined_factor(self.factors[1], self.factors[2])

    def __call__(self, x):
        return tcl_forward(x, self.factors, self.f23t)


if __name__ == "__main__":
    key = jax.random.PRNGKey(0)
    k_x, k_p = jax.random.split(key)

    # input activation tensor (batch, m1, m2, m3) -> output (batch, n1, n2, n3)
    B, m1, m2, m3 = 2, 4, 16, 16
    n1, n2, n3 = 8, 8, 32

    x = jax.random.normal(k_x, (B, m1, m2, m3), dtype=jnp.float32)
    tcl = TCL((B, m1, m2, m3), (B, n1, n2, n3), k_p)

    y = jax.block_until_ready(tcl(x))
    assert y.shape == (B, n1, n2, n3), y.shape
    assert y.dtype == x.dtype, y.dtype

    y_ref = tcl_reference(x, tcl.factors)
    assert jnp.allclose(y, y_ref, atol=1e-4, rtol=1e-4), "mismatch vs reference"

    print("KERNEL_OK")
</pallas_src>

<mosaic_0001>
module attributes {stable_mosaic.version = 11 : i64} {
  func.func @_tcl_fused_kernel(%arg0: i32, %arg1: memref<8x256xf32, #tpu.memory_space<vmem>>, %arg2: memref<256x256xf32, #tpu.memory_space<vmem>>, %arg3: memref<8x4xf32, #tpu.memory_space<vmem>>, %arg4: memref<16x256xf32, #tpu.memory_space<vmem>>) attributes {dimension_semantics = [#tpu.dimension_semantics<parallel>], iteration_bounds = array<i64: 1>, scalar_prefetch = 0 : i64, scratch_operands = 0 : i64, tpu.core_type = #tpu.core_type<tc>, window_params = [{transform_indices = @transform_0, window_bounds = array<i64: 8, 256>}, {pipeline_mode = #tpu.pipeline_mode<synchronous>, transform_indices = @transform_1, window_bounds = array<i64: 256, 256>}, {pipeline_mode = #tpu.pipeline_mode<synchronous>, transform_indices = @transform_2, window_bounds = array<i64: 8, 4>}, {transform_indices = @transform_3, window_bounds = array<i64: 16, 256>}]} {
    %c0 = arith.constant 0 : index
    %c0_0 = arith.constant 0 : index
    %0 = vector.load %arg1[%c0, %c0_0] : memref<8x256xf32, #tpu.memory_space<vmem>>, vector<8x256xf32>
    %c0_1 = arith.constant 0 : index
    %c0_2 = arith.constant 0 : index
    %1 = vector.load %arg2[%c0_1, %c0_2] : memref<256x256xf32, #tpu.memory_space<vmem>>, vector<256x256xf32>
    %cst = arith.constant dense<0.000000e+00> : vector<8x256xf32>
    %2 = tpu.matmul %0, %1, %cst {dimension_numbers = #tpu.dot_dimension_numbers<[1], [0], [0], [1], [0, 0, 1, 1], [], []>} : vector<8x256xf32>, vector<256x256xf32>, vector<8x256xf32> -> vector<8x256xf32>
    %c0_3 = arith.constant 0 : index
    %c0_4 = arith.constant 0 : index
    %3 = vector.load %arg3[%c0_3, %c0_4] : memref<8x4xf32, #tpu.memory_space<vmem>>, vector<8x4xf32>
    %4 = vector.extract_strided_slice %3 {offsets = [0, 0], sizes = [8, 1], strides = [1, 1]} : vector<8x4xf32> to vector<8x1xf32>
    %5 = vector.extract_strided_slice %3 {offsets = [0, 1], sizes = [8, 1], strides = [1, 1]} : vector<8x4xf32> to vector<8x1xf32>
    %6 = vector.extract_strided_slice %3 {offsets = [0, 2], sizes = [8, 1], strides = [1, 1]} : vector<8x4xf32> to vector<8x1xf32>
    %7 = vector.extract_strided_slice %3 {offsets = [0, 3], sizes = [8, 1], strides = [1, 1]} : vector<8x4xf32> to vector<8x1xf32>
    %8 = vector.extract_strided_slice %2 {offsets = [0, 0], sizes = [1, 256], strides = [1, 1]} : vector<8x256xf32> to vector<1x256xf32>
    %9 = vector.broadcast %4 : vector<8x1xf32> to vector<8x256xf32>
    %10 = vector.broadcast %8 : vector<1x256xf32> to vector<8x256xf32>
    %11 = arith.mulf %9, %10 : vector<8x256xf32>
    %12 = vector.extract_strided_slice %2 {offsets = [1, 0], sizes = [1, 256], strides = [1, 1]} : vector<8x256xf32> to vector<1x256xf32>
    %13 = vector.broadcast %5 : vector<8x1xf32> to vector<8x256xf32>
    %14 = vector.broadcast %12 : vector<1x256xf32> to vector<8x256xf32>
    %15 = arith.mulf %13, %14 : vector<8x256xf32>
    %16 = arith.addf %11, %15 : vector<8x256xf32>
    %17 = vector.extract_strided_slice %2 {offsets = [2, 0], sizes = [1, 256], strides = [1, 1]} : vector<8x256xf32> to vector<1x256xf32>
    %18 = vector.broadcast %6 : vector<8x1xf32> to vector<8x256xf32>
    %19 = vector.broadcast %17 : vector<1x256xf32> to vector<8x256xf32>
    %20 = arith.mulf %18, %19 : vector<8x256xf32>
    %21 = arith.addf %16, %20 : vector<8x256xf32>
    %22 = vector.extract_strided_slice %2 {offsets = [3, 0], sizes = [1, 256], strides = [1, 1]} : vector<8x256xf32> to vector<1x256xf32>
    %23 = vector.broadcast %7 : vector<8x1xf32> to vector<8x256xf32>
    %24 = vector.broadcast %22 : vector<1x256xf32> to vector<8x256xf32>
    %25 = arith.mulf %23, %24 : vector<8x256xf32>
    %26 = arith.addf %21, %25 : vector<8x256xf32>
    %c0_5 = arith.constant 0 : index
    %c0_6 = arith.constant 0 : index
    %27 = vector.load %arg4[%c0_5, %c0_6] : memref<16x256xf32, #tpu.memory_space<vmem>>, vector<8x256xf32>
    tpu.vector_store %arg4[%c0_5, %c0_6], %26 {strides = array<i32>} : memref<16x256xf32, #tpu.memory_space<vmem>>, vector<8x256xf32>,
    %28 = vector.extract_strided_slice %2 {offsets = [4, 0], sizes = [1, 256], strides = [1, 1]} : vector<8x256xf32> to vector<1x256xf32>
    %29 = vector.broadcast %4 : vector<8x1xf32> to vector<8x256xf32>
    %30 = vector.broadcast %28 : vector<1x256xf32> to vector<8x256xf32>
    %31 = arith.mulf %29, %30 : vector<8x256xf32>
    %32 = vector.extract_strided_slice %2 {offsets = [5, 0], sizes = [1, 256], strides = [1, 1]} : vector<8x256xf32> to vector<1x256xf32>
    %33 = vector.broadcast %5 : vector<8x1xf32> to vector<8x256xf32>
    %34 = vector.broadcast %32 : vector<1x256xf32> to vector<8x256xf32>
    %35 = arith.mulf %33, %34 : vector<8x256xf32>
    %36 = arith.addf %31, %35 : vector<8x256xf32>
    %37 = vector.extract_strided_slice %2 {offsets = [6, 0], sizes = [1, 256], strides = [1, 1]} : vector<8x256xf32> to vector<1x256xf32>
    %38 = vector.broadcast %6 : vector<8x1xf32> to vector<8x256xf32>
    %39 = vector.broadcast %37 : vector<1x256xf32> to vector<8x256xf32>
    %40 = arith.mulf %38, %39 : vector<8x256xf32>
    %41 = arith.addf %36, %40 : vector<8x256xf32>
    %42 = vector.extract_strided_slice %2 {offsets = [7, 0], sizes = [1, 256], strides = [1, 1]} : vector<8x256xf32> to vector<1x256xf32>
    %43 = vector.broadcast %7 : vector<8x1xf32> to vector<8x256xf32>
    %44 = vector.broadcast %42 : vector<1x256xf32> to vector<8x256xf32>
    %45 = arith.mulf %43, %44 : vector<8x256xf32>
    %46 = arith.addf %41, %45 : vector<8x256xf32>
    %c8 = arith.constant 8 : index
    %c0_7 = arith.constant 0 : index
    %47 = vector.load %arg4[%c8, %c0_7] : memref<16x256xf32, #tpu.memory_space<vmem>>, vector<8x256xf32>
    tpu.vector_store %arg4[%c8, %c0_7], %46 {strides = array<i32>} : memref<16x256xf32, #tpu.memory_space<vmem>>, vector<8x256xf32>,
    return
  }
  func.func @transform_0(%arg0: i32) -> (i32, i32) {
    %c0_i32 = arith.constant 0 : i32
    %c0_i32_0 = arith.constant 0 : i32
    return %arg0, %c0_i32 : i32, i32
  }
  func.func @transform_1(%arg0: i32) -> (i32, i32) {
    %c0_i32 = arith.constant 0 : i32
    %c0_i32_0 = arith.constant 0 : i32
    %c0_i32_1 = arith.constant 0 : i32
    return %c0_i32, %c0_i32_0 : i32, i32
  }
  func.func @transform_2(%arg0: i32) -> (i32, i32) {
    %c0_i32 = arith.constant 0 : i32
    %c0_i32_0 = arith.constant 0 : i32
    %c0_i32_1 = arith.constant 0 : i32
    return %c0_i32, %c0_i32_0 : i32, i32
  }
  func.func @transform_3(%arg0: i32) -> (i32, i32) {
    %c0_i32 = arith.constant 0 : i32
    %c0_i32_0 = arith.constant 0 : i32
    return %arg0, %c0_i32 : i32, i32
  }
}

</mosaic_0001>

<llo_original>
// kernel: _tcl_forward_fused.1
$region0: #{_tcl_forward_fused.1}
  #allocation0 [shape = 'u32[]', space=smem, size = 0x4, offset = 0x4, fixed_abs, tag = 'smem constant byte address 0x4 - core index']
  #allocation1 [shape = 'u32[72,128]{1,0:T(1,128)}', space=vmem, size = 0x9000, scoped, tag = 'internal scratch']
  %s0 = inlined_call_operand.vmem [shape: f32[8,256], index: 0, kind: input, shape index: {}]
  %s1 = inlined_call_operand.hbm [shape: f32[256,256], index: 1, kind: input, shape index: {}]
  %s2 = inlined_call_operand.vmem [shape: f32[8,4], index: 2, kind: input, shape index: {}]
  %s3 = inlined_call_operand.hbm [shape: f32[16,256], index: 3, kind: output, shape index: {}]
  %s4 = sld [smem:[#allocation0]]
  $region26: #{_tcl_forward_fused.1} parent=0
    _
  %s6 = ssub.s32 1, %s4
  %s7 = scalar_select 0, %s6, %s4
  $region1: #{_tcl_forward_fused.1} parent=0
    #allocation2 [shape = 'u8[262144]{0}', space=vmem, size = 0x40000, scoped, tag = 'input window, operand 1, single buffered']
    #allocation3 [shape = 's32[1]{0}', space=sflag, size = 0x4, scoped, tag = 'scoped memory for _tcl_forward_fused.1']
    #allocation4 [shape = 's32[1]{0}', space=sflag, size = 0x4, scoped, tag = 'scoped memory for _tcl_forward_fused.1']
    #allocation5 [shape = 'u8[16384]{0}', space=vmem, size = 0x4000, scoped, tag = 'output window, operand 0, single buffered']
    %8 = vsyncpa [#allocation3], 0
    %9 = vsyncpa [#allocation4], 0
    // Predicated region
    $region2: #{_tcl_forward_fused.1} parent=1 // pred_check
      _
    $region3: #{_tcl_forward_fused.1} parent=1 // pred_check_branch
      %11 = sbr.rel (0) target = $region5
    $region4: #{_tcl_forward_fused.1} parent=1 // pred_region
      _
    $region5: #{_tcl_forward_fused.1} parent=1 // pred_fallthru
      _
    // Predicated region
    $region6: #{_tcl_forward_fused.1} parent=1 // pred_check
      _
    $region7: #{_tcl_forward_fused.1} parent=1 // pred_check_branch
      %13 = sbr.rel (0) target = $region9
    $region8: #{_tcl_forward_fused.1} parent=1 // pred_region
      %15 = vsyncadd [#allocation3], 0
      %s16 = sshll.u32 %s1, 4
      %s17 = int_to_ptr.hbm [resolvable:$true] %s16
      %s18 = sshll.u32 [#allocation2], 4
      %s19 = int_to_ptr.vmem [resolvable:$true] %s18
      %24 = dma.hbm_to_vmem [thread:$0]  %s17, 8192, %s19, [#allocation3], 256, 256, 16
    $region9: #{_tcl_forward_fused.1} parent=1 // pred_fallthru
      _
    // Predicated region
    $region10: #{_tcl_forward_fused.1} parent=1 // pred_check
      _
    $region11: #{_tcl_forward_fused.1} parent=1 // pred_check_branch
      %26 = sbr.rel (0) target = $region13
    $region12: #{_tcl_forward_fused.1} parent=1 // pred_region
      _
    $region13: #{_tcl_forward_fused.1} parent=1 // pred_fallthru
      _
    // Predicated region
    $region14: #{_tcl_forward_fused.1} parent=1 // pred_check
      _
    $region15: #{_tcl_forward_fused.1} parent=1 // pred_check_branch
      %28 = sbr.rel (0) target = $region17
    $region16: #{_tcl_forward_fused.1} parent=1 // pred_region
      %30 = dma.done [#allocation3], 8192
    $region17: #{_tcl_forward_fused.1} parent=1 // pred_fallthru
      _
    %v31 = vld [vmem:[%s0] sm:$0xff]
    %v32 = vld [vmem:[%s0 + $0x8] sm:$0xff]
    %v33 = vld [vmem:[#allocation2] sm:$0xff]
    %v34 = vld [vmem:[#allocation2 + $0x8] sm:$0xff]
    %v35 = vld [vmem:[#allocation2 + $0x10] sm:$0xff]
    %v36 = vld [vmem:[#allocation2 + $0x18] sm:$0xff]
    %v37 = vld [vmem:[#allocation2 + $0x20] sm:$0xff]
    %v38 = vld [vmem:[#allocation2 + $0x28] sm:$0xff]
    %v39 = vld [vmem:[#allocation2 + $0x30] sm:$0xff]
    %v40 = vld [vmem:[#allocation2 + $0x38] sm:$0xff]
    %v41 = vld [vmem:[#allocation2 + $0x40] sm:$0xff]
    %v42 = vld [vmem:[#allocation2 + $0x48] sm:$0xff]
    %v43 = vld [vmem:[#allocation2 + $0x50] sm:$0xff]
    %v44 = vld [vmem:[#allocation2 + $0x58] sm:$0xff]
    %v45 = vld [vmem:[#allocation2 + $0x60] sm:$0xff]
    %v46 = vld [vmem:[#allocation2 + $0x68] sm:$0xff]
    %v47 = vld [vmem:[#allocation2 + $0x70] sm:$0xff]
    %v48 = vld [vmem:[#allocation2 + $0x78] sm:$0xff]
    %v49 = vld [vmem:[#allocation2 + $0x80] sm:$0xff]
    %v50 = vld [vmem:[#allocation2 + $0x88] sm:$0xff]
    %v51 = vld [vmem:[#allocation2 + $0x90] sm:$0xff]
    %v52 = vld [vmem:[#allocation2 + $0x98] sm:$0xff]
    %v53 = vld [vmem:[#allocation2 + $0xa0] sm:$0xff]
    %v54 = vld [vmem:[#allocation2 + $0xa8] sm:$0xff]
    %v55 = vld [vmem:[#allocation2 + $0xb0] sm:$0xff]
    %v56 = vld [vmem:[#allocation2 + $0xb8] sm:$0xff]
    %v57 = vld [vmem:[#allocation2 + $0xc0] sm:$0xff]
    %v58 = vld [vmem:[#allocation2 + $0xc8] sm:$0xff]
    %v59 = vld [vmem:[#allocation2 + $0xd0] sm:$0xff]
    %v60 = vld [vmem:[#allocation2 + $0xd8] sm:$0xff]
    %v61 = vld [vmem:[#allocation2 + $0xe0] sm:$0xff]
    %v62 = vld [vmem:[#allocation2 + $0xe8] sm:$0xff]
    %v63 = vld [vmem:[#allocation2 + $0xf0] sm:$0xff]
    %v64 = vld [vmem:[#allocation2 + $0xf8] sm:$0xff]
    %v65 = vld [vmem:[#allocation2 + $0x100] sm:$0xff]
    %v66 = vld [vmem:[#allocation2 + $0x108] sm:$0xff]
    %v67 = vld [vmem:[#allocation2 + $0x110] sm:$0xff]
    %v68 = vld [vmem:[#allocation2 + $0x118] sm:$0xff]
    %v69 = vld [vmem:[#allocation2 + $0x120] sm:$0xff]
    %v70 = vld [vmem:[#allocation2 + $0x128] sm:$0xff]
    %v71 = vld [vmem:[#allocation2 + $0x130] sm:$0xff]
    %v72 = vld [vmem:[#allocation2 + $0x138] sm:$0xff]
    %v73 = vld [vmem:[#allocation2 + $0x140] sm:$0xff]
    %v74 = vld [vmem:[#allocation2 + $0x148] sm:$0xff]
    %v75 = vld [vmem:[#allocation2 + $0x150] sm:$0xff]
    %v76 = vld [vmem:[#allocation2 + $0x158] sm:$0xff]
    %v77 = vld [vmem:[#allocation2 + $0x160] sm:$0xff]
    %v78 = vld [vmem:[#allocation2 + $0x168] sm:$0xff]
    %v79 = vld [vmem:[#allocation2 + $0x170] sm:$0xff]
    %v80 = vld [vmem:[#allocation2 + $0x178] sm:$0xff]
    %v81 = vld [vmem:[#allocation2 + $0x180] sm:$0xff]
    %v82 = vld [vmem:[#allocation2 + $0x188] sm:$0xff]
    %v83 = vld [vmem:[#allocation2 + $0x190] sm:$0xff]
    %v84 = vld [vmem:[#allocation2 + $0x198] sm:$0xff]
    %v85 = vld [vmem:[#allocation2 + $0x1a0] sm:$0xff]
    %v86 = vld [vmem:[#allocation2 + $0x1a8] sm:$0xff]
    %v87 = vld [vmem:[#allocation2 + $0x1b0] sm:$0xff]
    %v88 = vld [vmem:[#allocation2 + $0x1b8] sm:$0xff]
    %v89 = vld [vmem:[#allocation2 + $0x1c0] sm:$0xff]
    %v90 = vld [vmem:[#allocation2 + $0x1c8] sm:$0xff]
    %v91 = vld [vmem:[#allocation2 + $0x1d0] sm:$0xff]
    %v92 = vld [vmem:[#allocation2 + $0x1d8] sm:$0xff]
    %v93 = vld [vmem:[#allocation2 + $0x1e0] sm:$0xff]
    %v94 = vld [vmem:[#allocation2 + $0x1e8] sm:$0xff]
    %v95 = vld [vmem:[#allocation2 + $0x1f0] sm:$0xff]
    %v96 = vld [vmem:[#allocation2 + $0x1f8] sm:$0xff]
    %97 = vmatpush.msra.mxu0 %v63
    %98 = vmatpush.msra.mxu0 %v61
    %99 = vmatpush.msra.mxu0 %v59
    %100 = vmatpush.msra.mxu0 %v57
    %101 = vmatpush.msra.mxu0 %v55
    %102 = vmatpush.msra.mxu0 %v53
    %103 = vmatpush.msra.mxu0 %v51
    %104 = vmatpush.msra.mxu0 %v49
    %105 = vmatpush.msra.mxu0 %v47
    %106 = vmatpush.msra.mxu0 %v45
    %107 = vmatpush.msra.mxu0 %v43
    %108 = vmatpush.msra.mxu0 %v41
    %109 = vmatpush.msra.mxu0 %v39
    %110 = vmatpush.msra.mxu0 %v37
    %111 = vmatpush.msra.mxu0 %v35
    %112 = vmatpush.msra.mxu0 %v33
    %113 = vmatmul.f32.gmra.mxu0 %v31
    %v114 = vpop.f32.mrf.mxu0
    %v115 = vadd.f32 0.0, %v114
    %116 = vdwg.mxu0
    %117 = vmatpush.msra.mxu0 %v95
    %118 = vmatpush.msra.mxu0 %v93
    %119 = vmatpush.msra.mxu0 %v91
    %120 = vmatpush.msra.mxu0 %v89
    %121 = vmatpush.msra.mxu0 %v87
    %122 = vmatpush.msra.mxu0 %v85
    %123 = vmatpush.msra.mxu0 %v83
    %124 = vmatpush.msra.mxu0 %v81
    %125 = vmatpush.msra.mxu0 %v79
    %126 = vmatpush.msra.mxu0 %v77
    %127 = vmatpush.msra.mxu0 %v75
    %128 = vmatpush.msra.mxu0 %v73
    %129 = vmatpush.msra.mxu0 %v71
    %130 = vmatpush.msra.mxu0 %v69
    %131 = vmatpush.msra.mxu0 %v67
    %132 = vmatpush.msra.mxu0 %v65
    %133 = vmatmul.f32.gmra.mxu0 %v32
    %v134 = vpop.f32.mrf.mxu0
    %v135 = vadd.f32 %v115, %v134
    %136 = vdwg.mxu0
    %137 = vmatpush.msra.mxu0 %v64
    %138 = vmatpush.msra.mxu0 %v62
    %139 = vmatpush.msra.mxu0 %v60
    %140 = vmatpush.msra.mxu0 %v58
    %141 = vmatpush.msra.mxu0 %v56
    %142 = vmatpush.msra.mxu0 %v54
    %143 = vmatpush.msra.mxu0 %v52
    %144 = vmatpush.msra.mxu0 %v50
    %145 = vmatpush.msra.mxu0 %v48
    %146 = vmatpush.msra.mxu0 %v46
    %147 = vmatpush.msra.mxu0 %v44
    %148 = vmatpush.msra.mxu0 %v42
    %149 = vmatpush.msra.mxu0 %v40
    %150 = vmatpush.msra.mxu0 %v38
    %151 = vmatpush.msra.mxu0 %v36
    %152 = vmatpush.msra.mxu0 %v34
    %153 = vmatmul.f32.gmra.mxu0 %v31
    %v154 = vpop.f32.mrf.mxu0
    %v155 = vadd.f32 0.0, %v154
    %156 = vdwg.mxu0
    %157 = vmatpush.msra.mxu0 %v96
    %158 = vmatpush.msra.mxu0 %v94
    %159 = vmatpush.msra.mxu0 %v92
    %160 = vmatpush.msra.mxu0 %v90
    %161 = vmatpush.msra.mxu0 %v88
    %162 = vmatpush.msra.mxu0 %v86
    %163 = vmatpush.msra.mxu0 %v84
    %164 = vmatpush.msra.mxu0 %v82
    %165 = vmatpush.msra.mxu0 %v80
    %166 = vmatpush.msra.mxu0 %v78
    %167 = vmatpush.msra.mxu0 %v76
    %168 = vmatpush.msra.mxu0 %v74
    %169 = vmatpush.msra.mxu0 %v72
    %170 = vmatpush.msra.mxu0 %v70
    %171 = vmatpush.msra.mxu0 %v68
    %172 = vmatpush.msra.mxu0 %v66
    %173 = vmatmul.f32.gmra.mxu0 %v32
    %v174 = vpop.f32.mrf.mxu0
    %v175 = vadd.f32 %v155, %v174
    %176 = vdwg.mxu0
    %v177 = vld [vmem:[%s2] sm:$0xff]
    %179 = vset.pattern.permute.xlu0 0
    %180 = vperm.xlu0 %179, %v177
    %v181 = vpop.permute.xlu0 %180
    %v183 = vperm.slane %v135, 0
    %v184 = vperm.slane %v175, 0
    %v185 = vmul.f32 %v181, %v183
    %v186 = vmul.f32 %v181, %v184
    %187 = vset.pattern.permute.xlu0 1
    %188 = vperm.xlu0 %187, %v177
    %v189 = vpop.permute.xlu0 %188
    %v191 = vperm.slane %v135, 1
    %v192 = vperm.slane %v175, 1
    %v193 = vmul.f32 %v189, %v191
    %v194 = vmul.f32 %v189, %v192
    %v195 = vadd.f32 %v185, %v193
    %v196 = vadd.f32 %v186, %v194
    %197 = vset.pattern.permute.xlu0 2
    %198 = vperm.xlu0 %197, %v177
    %v199 = vpop.permute.xlu0 %198
    %v201 = vperm.slane %v135, 2
    %v202 = vperm.slane %v175, 2
    %v203 = vmul.f32 %v199, %v201
    %v204 = vmul.f32 %v199, %v202
    %v205 = vadd.f32 %v195, %v203
    %v206 = vadd.f32 %v196, %v204
    %207 = vset.pattern.permute.xlu0 3
    %208 = vperm.xlu0 %207, %v177
    %v209 = vpop.permute.xlu0 %208
    %v211 = vperm.slane %v135, 3
    %v212 = vperm.slane %v175, 3
    %v213 = vmul.f32 %v209, %v211
    %v214 = vmul.f32 %v209, %v212
    %v215 = vadd.f32 %v205, %v213
    %v216 = vadd.f32 %v206, %v214
    %217 = vst [vmem:[#allocation5] sm:$0xff] %v215
    %218 = vst [vmem:[#allocation5 + $0x8] sm:$0xff] %v216
    %v219 = vperm.slane %v135, 4
    %v220 = vperm.slane %v175, 4
    %v221 = vmul.f32 %v181, %v219
    %v222 = vmul.f32 %v181, %v220
    %v223 = vperm.slane %v135, 5
    %v224 = vperm.slane %v175, 5
    %v225 = vmul.f32 %v189, %v223
    %v226 = vmul.f32 %v189, %v224
    %v227 = vadd.f32 %v221, %v225
    %v228 = vadd.f32 %v222, %v226
    %v229 = vperm.slane %v135, 6
    %v230 = vperm.slane %v175, 6
    %v231 = vmul.f32 %v199, %v229
    %v232 = vmul.f32 %v199, %v230
    %v233 = vadd.f32 %v227, %v231
    %v234 = vadd.f32 %v228, %v232
    %v235 = vperm.slane %v135, 7
    %v236 = vperm.slane %v175, 7
    %v237 = vmul.f32 %v209, %v235
    %v238 = vmul.f32 %v209, %v236
    %v239 = vadd.f32 %v233, %v237
    %v240 = vadd.f32 %v234, %v238
    %241 = vst [vmem:[#allocation5 + $0x10] sm:$0xff] %v239
    %242 = vst [vmem:[#allocation5 + $0x18] sm:$0xff] %v240
    // Predicated region
    $region18: #{_tcl_forward_fused.1} parent=1 // pred_check
      _
    $region19: #{_tcl_forward_fused.1} parent=1 // pred_check_branch
      %244 = sbr.rel (0) target = $region21
    $region20: #{_tcl_forward_fused.1} parent=1 // pred_region
      %246 = vsyncadd [#allocation4], 0
      %s247 = sshll.u32 [#allocation5], 4
      %s248 = int_to_ptr.vmem [resolvable:$true] %s247
      %s249 = sshll.u32 %s3, 4
      %s250 = int_to_ptr.hbm [resolvable:$true] %s249
      %255 = dma.vmem_to_hbm [thread:$0]  %s248, 512, %s250, [#allocation4], 256, 256, 16
    $region21: #{_tcl_forward_fused.1} parent=1 // pred_fallthru
      _
    // Predicated region
    $region22: #{_tcl_forward_fused.1} parent=1 // pred_check
      _
    $region23: #{_tcl_forward_fused.1} parent=1 // pred_check_branch
      %257 = sbr.rel (0) target = $region25
    $region24: #{_tcl_forward_fused.1} parent=1 // pred_region
      %259 = dma.done [#allocation4], 512
    $region25: #{_tcl_forward_fused.1} parent=1 // pred_fallthru
      _
    %260 = vsyncpa [#allocation3], 1
    %261 = vsyncpa [#allocation4], 1

</llo_original>
